<compile_context>
chip_gen: v7x
topology: tpu7x:2x2x1
jax: 0.10.0
libtpu: 0.0.40
codegen_flags: <defaults>
</compile_context>

<pallas_src>
import functools

import jax
import jax.numpy as jnp
from jax.experimental import pallas as pl
from jax.experimental.pallas import tpu as pltpu

HIDDEN = 64
PAD = 128  # lane-dense padded hidden width / fused-head width


def acnet_kernel(x_ref, w1_ref, b1_ref, w2_ref, b2_ref, wf_ref, bf_ref,
                 probs_ref, value_ref, *, out_dim, bf16_matmul):
    mxu_dt = jnp.bfloat16 if bf16_matmul else jnp.float32

    x = x_ref[...].astype(mxu_dt)

    # fc1 + ReLU (MXU matmul, f32 accumulate; bias/ReLU kept in f32 -- v5e
    # VPU/EUP have no bf16 support).
    h1 = jnp.dot(x, w1_ref[...].astype(mxu_dt),
                 preferred_element_type=jnp.float32) + b1_ref[...]
    h1 = jnp.maximum(h1, 0.0)

    # fc2 + ReLU (K = N = 128, lane-dense after padding).
    h2 = jnp.dot(h1.astype(mxu_dt), w2_ref[...].astype(mxu_dt),
                 preferred_element_type=jnp.float32) + b2_ref[...]
    h2 = jnp.maximum(h2, 0.0)

    # Fused actor+critic head: single (128, 128) matmul.
    #   cols [0, out_dim)  -> actor logits
    #   col   out_dim      -> critic value
    #   cols (out_dim,128) -> zero padding
    fused = jnp.dot(h2.astype(mxu_dt), wf_ref[...].astype(mxu_dt),
                    preferred_element_type=jnp.float32) + bf_ref[...]

    col = jax.lax.broadcasted_iota(jnp.int32, fused.shape, 1)
    is_actor = col < out_dim

    # Numerically-stable softmax over the actor columns only (all f32).
    logits = jnp.where(is_actor, fused, jnp.float32(-1e30))
    m = jnp.max(logits, axis=1, keepdims=True)
    e = jnp.where(is_actor, jnp.exp(logits - m), 0.0)
    denom = jnp.sum(e, axis=1, keepdims=True)
    probs = e * pl.reciprocal(denom, approx=False)  # exact; see perf review

    # Narrow stores: ~20 B/row of useful data instead of a 512 B/row padded
    # slab, and no post-call slab re-read/slice.
    probs_ref[...] = probs[:, :out_dim].astype(probs_ref.dtype)
    value_ref[...] = fused[:, out_dim:out_dim + 1].astype(value_ref.dtype)


def prepare_params(raw, out_dim, hidden=HIDDEN):
    """One-time layout prep (hoisted out of the forward hot path):
    fuse actor+critic heads into one weight and zero-pad hidden width to 128."""
    ph = PAD - hidden
    w1 = jnp.pad(raw["w1"], ((0, 0), (0, ph)))            # (in, 128)
    b1 = jnp.pad(raw["b1"], ((0, 0), (0, ph)))            # (1, 128)
    w2 = jnp.pad(raw["w2"], ((0, ph), (0, ph)))           # (128, 128)
    b2 = jnp.pad(raw["b2"], ((0, 0), (0, ph)))            # (1, 128)
    wf = jnp.concatenate([raw["wa"], raw["wc"]], axis=1)  # (hidden, out_dim+1)
    bf = jnp.concatenate([raw["ba"], raw["bc"]], axis=1)  # (1, out_dim+1)
    wf = jnp.pad(wf, ((0, ph), (0, PAD - wf.shape[1])))   # (128, 128)
    bf = jnp.pad(bf, ((0, 0), (0, PAD - bf.shape[1])))    # (1, 128)
    return dict(w1=w1, b1=b1, w2=w2, b2=b2, wf=wf, bf=bf)


def _pick_block_b(B):
    """None => gridless (whole batch resident in VMEM). Otherwise a large tile
    (~4096 rows) that divides B, keeps >= 2 grid steps (v7x dual-TC), and is a
    sublane multiple. Per-step pipeline overhead (~0.35 us) is amortized."""
    if B < 1024:
        return None
    target = 4096
    steps = max(2, pl.cdiv(B, target))
    while B % steps != 0:
        steps += 1
    bb = B // steps
    return bb if bb % 8 == 0 else None


@functools.partial(jax.jit,
                   static_argnames=("out_dim", "block_b", "bf16_matmul"))
def acnetwork_forward(x, prep, out_dim, block_b=None, bf16_matmul=False):
    """prep: output of prepare_params(). Returns (action_probs, state_values)."""
    B, in_dim = x.shape
    kernel = functools.partial(acnet_kernel, out_dim=out_dim,
                               bf16_matmul=bf16_matmul)
    args = (x, prep["w1"], prep["b1"], prep["w2"], prep["b2"],
            prep["wf"], prep["bf"])
    out_shape = (jax.ShapeDtypeStruct((B, out_dim), jnp.float32),
                 jax.ShapeDtypeStruct((B, 1), jnp.float32))

    if block_b is None:
        block_b = _pick_block_b(B)

    if block_b is None or block_b >= B:
        # Small batch: everything (<~150 KiB) resident in VMEM. No grid, no
        # double-buffering, no per-step pipeline overhead.
        probs, values = pl.pallas_call(
            kernel,
            out_shape=out_shape,
            in_specs=[pl.BlockSpec(memory_space=pltpu.VMEM) for _ in args],
            out_specs=(pl.BlockSpec(memory_space=pltpu.VMEM),
                       pl.BlockSpec(memory_space=pltpu.VMEM)),
        )(*args)
        return probs, values

    assert B % block_b == 0 and block_b % 8 == 0, \
        "batch must be a multiple of block_b and block_b a multiple of 8"

    def resident(a):
        # default-arg capture avoids the late-binding closure footgun
        return pl.BlockSpec(a.shape, lambda i, nd=a.ndim: (0,) * nd)

    # VMEM budget: streamed x / output tiles (x2 for double buffering),
    # resident weights, and the (block_b, 128) f32 intermediates. 2x headroom,
    # floored at the 32 MiB scoped default, clamped to v7x's 64 MiB physical.
    tile_bytes = 2 * block_b * (in_dim + out_dim + 1) * 4
    weight_bytes = 2 * sum(int(a.size) for a in args[1:]) * 4
    interm_bytes = 3 * block_b * PAD * 4
    vmem_limit = int(max(32 * 2**20,
                         min(64 * 2**20,
                             2 * (tile_bytes + weight_bytes + interm_bytes))))

    probs, values = pl.pallas_call(
        kernel,
        out_shape=out_shape,
        grid=(B // block_b,),
        in_specs=[pl.BlockSpec((block_b, in_dim), lambda i: (i, 0))]
                 + [resident(a) for a in args[1:]],
        out_specs=(pl.BlockSpec((block_b, out_dim), lambda i: (i, 0)),
                   pl.BlockSpec((block_b, 1), lambda i: (i, 0))),
        compiler_params=pltpu.CompilerParams(
            dimension_semantics=("parallel",),   # shards batch across v7x dual-TC
            vmem_limit_bytes=vmem_limit),
    )(*args)
    return probs, values


def init_params(key, input_dim, output_dim, hidden=HIDDEN):
    """PyTorch-style Linear init (uniform +-1/sqrt(fan_in)); weights stored (in, out)."""
    def linear(key, fan_in, fan_out):
        kw, kb = jax.random.split(key)
        bound = 1.0 / jnp.sqrt(float(fan_in))
        w = jax.random.uniform(kw, (fan_in, fan_out), jnp.float32, -bound, bound)
        b = jax.random.uniform(kb, (1, fan_out), jnp.float32, -bound, bound)
        return w, b

    k1, k2, k3, k4 = jax.random.split(key, 4)
    w1, b1 = linear(k1, input_dim, hidden)
    w2, b2 = linear(k2, hidden, hidden)
    wa, ba = linear(k3, hidden, output_dim)
    wc, bc = linear(k4, hidden, 1)
    return dict(w1=w1, b1=b1, w2=w2, b2=b2, wa=wa, ba=ba, wc=wc, bc=bc)


def reference_forward(x, p):
    h1 = jnp.maximum(x @ p["w1"] + p["b1"], 0.0)
    h2 = jnp.maximum(h1 @ p["w2"] + p["b2"], 0.0)
    probs = jax.nn.softmax(h2 @ p["wa"] + p["ba"], axis=1)
    values = h2 @ p["wc"] + p["bc"]
    return probs, values


if __name__ == "__main__":
    key = jax.random.PRNGKey(0)
    kx, kp, kx2 = jax.random.split(key, 3)

    batch, input_dim, output_dim = 8, 16, 4
    params = init_params(kp, input_dim, output_dim)
    prep = prepare_params(params, output_dim)   # one-time prep, out of hot path

    x = jax.random.normal(kx, (batch, input_dim), jnp.float32)

    # small-batch gridless path (exact f32)
    probs, values = acnetwork_forward(x, prep, out_dim=output_dim)
    jax.block_until_ready((probs, values))

    ref_probs, ref_values = reference_forward(x, params)
    assert probs.shape == (batch, output_dim)
    assert values.shape == (batch, 1)
    assert jnp.allclose(probs, ref_probs, atol=1e-5, rtol=1e-5)
    assert jnp.allclose(values, ref_values, atol=1e-5, rtol=1e-5)
    assert jnp.allclose(jnp.sum(probs, axis=1), 1.0, atol=1e-5)

    # large-batch path: auto block_b -> 2 grid steps of 2048 rows ("parallel")
    big_b = 4096
    x_big = jax.random.normal(kx2, (big_b, input_dim), jnp.float32)
    probs_b, values_b = acnetwork_forward(x_big, prep, out_dim=output_dim)
    jax.block_until_ready((probs_b, values_b))
    ref_pb, ref_vb = reference_forward(x_big, params)
    assert probs_b.shape == (big_b, output_dim)
    assert values_b.shape == (big_b, 1)
    assert jnp.allclose(probs_b, ref_pb, atol=1e-5, rtol=1e-5)
    assert jnp.allclose(values_b, ref_vb, atol=1e-5, rtol=1e-5)

    # optional bf16 MXU-operand mode (v6e/v7x throughput); loose smoke tolerance
    probs_h, values_h = acnetwork_forward(x_big, prep, out_dim=output_dim,
                                          bf16_matmul=True)
    jax.block_until_ready((probs_h, values_h))
    assert jnp.allclose(jnp.sum(probs_h, axis=1), 1.0, atol=1e-3)
    assert jnp.allclose(probs_h, ref_pb, atol=1e-1)
    assert jnp.allclose(values_h, ref_vb, atol=1e-1)

    print("KERNEL_OK")
</pallas_src>

<mosaic_0001>
module attributes {stable_mosaic.version = 11 : i64} {
  func.func @acnet_kernel(%arg0: memref<8x16xf32, #tpu.memory_space<vmem>>, %arg1: memref<16x128xf32, #tpu.memory_space<vmem>>, %arg2: memref<1x128xf32, #tpu.memory_space<vmem>>, %arg3: memref<128x128xf32, #tpu.memory_space<vmem>>, %arg4: memref<1x128xf32, #tpu.memory_space<vmem>>, %arg5: memref<128x128xf32, #tpu.memory_space<vmem>>, %arg6: memref<1x128xf32, #tpu.memory_space<vmem>>, %arg7: memref<8x4xf32, #tpu.memory_space<vmem>>, %arg8: memref<8x1xf32, #tpu.memory_space<vmem>>) attributes {dimension_semantics = [], scalar_prefetch = 0 : i64, scratch_operands = 0 : i64, tpu.core_type = #tpu.core_type<tc>} {
    %c0 = arith.constant 0 : index
    %c0_0 = arith.constant 0 : index
    %0 = vector.load %arg0[%c0, %c0_0] : memref<8x16xf32, #tpu.memory_space<vmem>>, vector<8x16xf32>
    %c0_1 = arith.constant 0 : index
    %c0_2 = arith.constant 0 : index
    %1 = vector.load %arg1[%c0_1, %c0_2] : memref<16x128xf32, #tpu.memory_space<vmem>>, vector<16x128xf32>
    %cst = arith.constant dense<0.000000e+00> : vector<8x128xf32>
    %2 = tpu.matmul %0, %1, %cst {dimension_numbers = #tpu.dot_dimension_numbers<[1], [0], [0], [1], [0, 0, 1, 1], [], []>} : vector<8x16xf32>, vector<16x128xf32>, vector<8x128xf32> -> vector<8x128xf32>
    %c0_3 = arith.constant 0 : index
    %c0_4 = arith.constant 0 : index
    %3 = vector.load %arg2[%c0_3, %c0_4] : memref<1x128xf32, #tpu.memory_space<vmem>>, vector<1x128xf32>
    %4 = vector.broadcast %3 : vector<1x128xf32> to vector<8x128xf32>
    %5 = arith.addf %2, %4 : vector<8x128xf32>
    %cst_5 = arith.constant 0.000000e+00 : f32
    %6 = vector.broadcast %cst_5 : f32 to vector<8x128xf32>
    %7 = arith.maximumf %5, %6 : vector<8x128xf32>
    %c0_6 = arith.constant 0 : index
    %c0_7 = arith.constant 0 : index
    %8 = vector.load %arg3[%c0_6, %c0_7] : memref<128x128xf32, #tpu.memory_space<vmem>>, vector<128x128xf32>
    %cst_8 = arith.constant dense<0.000000e+00> : vector<8x128xf32>
    %9 = tpu.matmul %7, %8, %cst_8 {dimension_numbers = #tpu.dot_dimension_numbers<[1], [0], [0], [1], [0, 0, 1, 1], [], []>} : vector<8x128xf32>, vector<128x128xf32>, vector<8x128xf32> -> vector<8x128xf32>
    %c0_9 = arith.constant 0 : index
    %c0_10 = arith.constant 0 : index
    %10 = vector.load %arg4[%c0_9, %c0_10] : memref<1x128xf32, #tpu.memory_space<vmem>>, vector<1x128xf32>
    %11 = vector.broadcast %10 : vector<1x128xf32> to vector<8x128xf32>
    %12 = arith.addf %9, %11 : vector<8x128xf32>
    %cst_11 = arith.constant 0.000000e+00 : f32
    %13 = vector.broadcast %cst_11 : f32 to vector<8x128xf32>
    %14 = arith.maximumf %12, %13 : vector<8x128xf32>
    %c0_12 = arith.constant 0 : index
    %c0_13 = arith.constant 0 : index
    %15 = vector.load %arg5[%c0_12, %c0_13] : memref<128x128xf32, #tpu.memory_space<vmem>>, vector<128x128xf32>
    %cst_14 = arith.constant dense<0.000000e+00> : vector<8x128xf32>
    %16 = tpu.matmul %14, %15, %cst_14 {dimension_numbers = #tpu.dot_dimension_numbers<[1], [0], [0], [1], [0, 0, 1, 1], [], []>} : vector<8x128xf32>, vector<128x128xf32>, vector<8x128xf32> -> vector<8x128xf32>
    %c0_15 = arith.constant 0 : index
    %c0_16 = arith.constant 0 : index
    %17 = vector.load %arg6[%c0_15, %c0_16] : memref<1x128xf32, #tpu.memory_space<vmem>>, vector<1x128xf32>
    %18 = vector.broadcast %17 : vector<1x128xf32> to vector<8x128xf32>
    %19 = arith.addf %16, %18 : vector<8x128xf32>
    %20 = tpu.iota {dimensions = array<i32: 1>} : vector<8x128xi32>
    %c4_i32 = arith.constant 4 : i32
    %21 = vector.broadcast %c4_i32 : i32 to vector<8x128xi32>
    %22 = arith.cmpi slt, %20, %21 : vector<8x128xi32>
    %cst_17 = arith.constant -1.000000e+30 : f32
    %23 = vector.broadcast %cst_17 : f32 to vector<8x128xf32>
    %24 = arith.select %22, %19, %23 : vector<8x128xi1>, vector<8x128xf32>
    %cst_18 = arith.constant dense<0xFF800000> : vector<8xf32>
    %25 = vector.multi_reduction <maximumf>, %24, %cst_18 [1] : vector<8x128xf32> to vector<8xf32>
    %26 = vector.shape_cast %25 : vector<8xf32> to vector<8x1xf32>
    %27 = vector.broadcast %26 : vector<8x1xf32> to vector<8x128xf32>
    %28 = arith.subf %24, %27 : vector<8x128xf32>
    %29 = math.exp %28 : vector<8x128xf32>
    %cst_19 = arith.constant 0.000000e+00 : f32
    %30 = vector.broadcast %cst_19 : f32 to vector<8x128xf32>
    %31 = arith.select %22, %29, %30 : vector<8x128xi1>, vector<8x128xf32>
    %cst_20 = arith.constant dense<0.000000e+00> : vector<8xf32>
    %32 = vector.multi_reduction <add>, %31, %cst_20 [1] : vector<8x128xf32> to vector<8xf32>
    %33 = vector.shape_cast %32 : vector<8xf32> to vector<8x1xf32>
    %34 = tpu.reciprocal %33 : vector<8x1xf32> -> vector<8x1xf32>
    %35 = vector.broadcast %34 : vector<8x1xf32> to vector<8x128xf32>
    %36 = arith.mulf %31, %35 : vector<8x128xf32>
    %37 = vector.extract_strided_slice %36 {offsets = [0, 0], sizes = [8, 4], strides = [1, 1]} : vector<8x128xf32> to vector<8x4xf32>
    %c0_21 = arith.constant 0 : index
    %c0_22 = arith.constant 0 : index
    %38 = vector.load %arg7[%c0_21, %c0_22] : memref<8x4xf32, #tpu.memory_space<vmem>>, vector<8x4xf32>
    tpu.vector_store %arg7[%c0_21, %c0_22], %37 {strides = array<i32>} : memref<8x4xf32, #tpu.memory_space<vmem>>, vector<8x4xf32>,
    %39 = vector.extract_strided_slice %19 {offsets = [0, 4], sizes = [8, 1], strides = [1, 1]} : vector<8x128xf32> to vector<8x1xf32>
    %c0_23 = arith.constant 0 : index
    %c0_24 = arith.constant 0 : index
    %40 = vector.load %arg8[%c0_23, %c0_24] : memref<8x1xf32, #tpu.memory_space<vmem>>, vector<8x1xf32>
    tpu.vector_store %arg8[%c0_23, %c0_24], %39 {strides = array<i32>} : memref<8x1xf32, #tpu.memory_space<vmem>>, vector<8x1xf32>,
    return
  }
}

</mosaic_0001>

<llo_original>
// kernel: acnetwork_forward.1
$region0: #{acnetwork_forward.1}
  #allocation0 [shape = 'u32[]', space=smem, size = 0x4, offset = 0x4, fixed_abs, tag = 'smem constant byte address 0x4 - core index']
  #allocation1 [shape = 'u32[144,128]{1,0:T(1,128)}', space=vmem, size = 0x12000, scoped, tag = 'internal scratch']
  %s0 = inlined_call_operand.hbm [shape: f32[8,16], index: 0, kind: input, shape index: {}]
  %s1 = inlined_call_operand.hbm [shape: f32[16,128], index: 1, kind: input, shape index: {}]
  %s2 = inlined_call_operand.vmem [shape: f32[1,128], index: 2, kind: input, shape index: {}]
  %s3 = inlined_call_operand.hbm [shape: f32[128,128], index: 3, kind: input, shape index: {}]
  %s4 = inlined_call_operand.vmem [shape: f32[1,128], index: 4, kind: input, shape index: {}]
  %s5 = inlined_call_operand.hbm [shape: f32[128,128], index: 5, kind: input, shape index: {}]
  %s6 = inlined_call_operand.vmem [shape: f32[1,128], index: 6, kind: input, shape index: {}]
  %s7 = inlined_call_operand.vmem [shape: f32[8,4], index: 7, kind: output, shape index: {0}]
  %s8 = inlined_call_operand.vmem [shape: f32[8,1], index: 8, kind: output, shape index: {1}]
  %9 = xla_tuple %s7, %s8
  %s10 = sld [smem:[#allocation0]]
  $region62: #{acnetwork_forward.1} parent=0
    _
  %s12 = ssub.s32 1, %s10
  %s13 = scalar_select 0, %s12, %s10
  $region1: #{acnetwork_forward.1} parent=0
    #allocation2 [shape = 'u8[4096]{0}', space=vmem, size = 0x1000, scoped, tag = 'input window, operand 0, single buffered']
    #allocation3 [shape = 's32[1]{0}', space=sflag, size = 0x4, scoped, tag = 'scoped memory for acnetwork_forward.1']
    #allocation4 [shape = 'u8[8192]{0}', space=vmem, size = 0x2000, scoped, tag = 'input window, operand 1, single buffered']
    #allocation5 [shape = 's32[1]{0}', space=sflag, size = 0x4, scoped, tag = 'scoped memory for acnetwork_forward.1']
    #allocation6 [shape = 'u8[65536]{0}', space=vmem, size = 0x10000, scoped, tag = 'input window, operand 3, single buffered']
    #allocation7 [shape = 'u8[65536]{0}', space=vmem, size = 0x10000, scoped, tag = 'input window, operand 5, single buffered']
    #allocation8 [shape = 's32[1]{0}', space=sflag, size = 0x4, scoped, tag = 'scoped memory for acnetwork_forward.1']
    %14 = vsyncpa [#allocation3], 0
    %15 = vsyncpa [#allocation5], 0
    %16 = vsyncpa [#allocation8], 0
    // Predicated region
    $region2: #{acnetwork_forward.1} parent=1 // pred_check
      _
    $region3: #{acnetwork_forward.1} parent=1 // pred_check_branch
      %18 = sbr.rel (0) target = $region5
    $region4: #{acnetwork_forward.1} parent=1 // pred_region
      %s20 = ssub.s32 128, 128
      %21 = vsyncadd [#allocation3], %s20
      %s23 = sshll.u32 [#allocation2], 4
      %s24 = int_to_ptr.vmem [resolvable:$true] %s23
      %26 = dma.hbm_to_vmem [thread:$0]  %s0, 128, %s24, [#allocation3]
    $region5: #{acnetwork_forward.1} parent=1 // pred_fallthru
      _
    // Predicated region
    $region6: #{acnetwork_forward.1} parent=1 // pred_check
      _
    $region7: #{acnetwork_forward.1} parent=1 // pred_check_branch
      %28 = sbr.rel (0) target = $region9
    $region8: #{acnetwork_forward.1} parent=1 // pred_region
      %s30 = ssub.s32 256, 256
      %31 = vsyncadd [#allocation5], %s30
      %s32 = sshll.u32 [#allocation4], 4
      %s33 = int_to_ptr.vmem [resolvable:$true] %s32
      %38 = dma.hbm_to_vmem [thread:$0]  %s1, 256, %s33, [#allocation5], 128, 128, 8
    $region9: #{acnetwork_forward.1} parent=1 // pred_fallthru
      _
    // Predicated region
    $region10: #{acnetwork_forward.1} parent=1 // pred_check
      _
    $region11: #{acnetwork_forward.1} parent=1 // pred_check_branch
      %40 = sbr.rel (0) target = $region13
    $region12: #{acnetwork_forward.1} parent=1 // pred_region
      _
    $region13: #{acnetwork_forward.1} parent=1 // pred_fallthru
      _
    // Predicated region
    $region14: #{acnetwork_forward.1} parent=1 // pred_check
      _
    $region15: #{acnetwork_forward.1} parent=1 // pred_check_branch
      %42 = sbr.rel (0) target = $region17
    $region16: #{acnetwork_forward.1} parent=1 // pred_region
      %s44 = ssub.s32 2048, 2048
      %45 = vsyncadd [#allocation5], %s44
      %s46 = sshll.u32 [#allocation6], 4
      %s47 = int_to_ptr.vmem [resolvable:$true] %s46
      %52 = dma.hbm_to_vmem [thread:$0]  %s3, 2048, %s47, [#allocation5], 128, 128, 8
    $region17: #{acnetwork_forward.1} parent=1 // pred_fallthru
      _
    // Predicated region
    $region18: #{acnetwork_forward.1} parent=1 // pred_check
      _
    $region19: #{acnetwork_forward.1} parent=1 // pred_check_branch
      %54 = sbr.rel (0) target = $region21
    $region20: #{acnetwork_forward.1} parent=1 // pred_region
      _
    $region21: #{acnetwork_forward.1} parent=1 // pred_fallthru
      _
    // Predicated region
    $region22: #{acnetwork_forward.1} parent=1 // pred_check
      _
    $region23: #{acnetwork_forward.1} parent=1 // pred_check_branch
      %56 = sbr.rel (0) target = $region25
    $region24: #{acnetwork_forward.1} parent=1 // pred_region
      %s58 = ssub.s32 2048, 2048
      %59 = vsyncadd [#allocation8], %s58
      %s60 = sshll.u32 [#allocation7], 4
      %s61 = int_to_ptr.vmem [resolvable:$true] %s60
      %66 = dma.hbm_to_vmem [thread:$0]  %s5, 2048, %s61, [#allocation8], 128, 128, 8
    $region25: #{acnetwork_forward.1} parent=1 // pred_fallthru
      _
    // Predicated region
    $region26: #{acnetwork_forward.1} parent=1 // pred_check
      _
    $region27: #{acnetwork_forward.1} parent=1 // pred_check_branch
      %68 = sbr.rel (0) target = $region29
    $region28: #{acnetwork_forward.1} parent=1 // pred_region
      _
    $region29: #{acnetwork_forward.1} parent=1 // pred_fallthru
      _
    // Predicated region
    $region30: #{acnetwork_forward.1} parent=1 // pred_check
      _
    $region31: #{acnetwork_forward.1} parent=1 // pred_check_branch
      %70 = sbr.rel (0) target = $region33
    $region32: #{acnetwork_forward.1} parent=1 // pred_region
      %71 = dma.done [#allocation3], 128
    $region33: #{acnetwork_forward.1} parent=1 // pred_fallthru
      _
    // Predicated region
    $region34: #{acnetwork_forward.1} parent=1 // pred_check
      _
    $region35: #{acnetwork_forward.1} parent=1 // pred_check_branch
      %73 = sbr.rel (0) target = $region37
    $region36: #{acnetwork_forward.1} parent=1 // pred_region
      %74 = dma.done [#allocation5], 256
    $region37: #{acnetwork_forward.1} parent=1 // pred_fallthru
      _
    // Predicated region
    $region38: #{acnetwork_forward.1} parent=1 // pred_check
      _
    $region39: #{acnetwork_forward.1} parent=1 // pred_check_branch
      %76 = sbr.rel (0) target = $region41
    $region40: #{acnetwork_forward.1} parent=1 // pred_region
      %77 = dma.done [#allocation5], 2048
    $region41: #{acnetwork_forward.1} parent=1 // pred_fallthru
      _
    // Predicated region
    $region42: #{acnetwork_forward.1} parent=1 // pred_check
      _
    $region43: #{acnetwork_forward.1} parent=1 // pred_check_branch
      %79 = sbr.rel (0) target = $region45
    $region44: #{acnetwork_forward.1} parent=1 // pred_region
      %80 = dma.done [#allocation8], 2048
    $region45: #{acnetwork_forward.1} parent=1 // pred_fallthru
      _
    %v81 = vld [vmem:[#allocation2] sm:$0xff]
    %v82 = vld [vmem:[#allocation4] sm:$0xff]
    %v83 = vld [vmem:[#allocation4 + $0x8] sm:$0xff]
    %v84 = vld [vmem:[%s2] sm:$0x1]
    %v86 = vlaneseq
    %v87 = vshrl.u32 %v86, 7
    %v88 = vsub.s32 0, %v87
    %v89 = vrot.slane %v84, %v88
    %vm91 = vcmask 130048
    %v93 = vsel %vm91, %v81, 0
    %95 = vmatprep.subr.mxu0 0.0
    %96 = vmatpush1.msra.mxu0 %v82
    %97 = vmatprep.subr.mxu0 0.0
    %98 = vmatpush1.msra.mxu0 %v83
    %99 = vmatprep.subr.mxu0 0.0
    %100 = vmatpush1.msra.mxu0 0.0
    %101 = vmatprep.subr.mxu0 0.0
    %102 = vmatpush1.msra.mxu0 0.0
    %103 = vmatprep.subr.mxu0 0.0
    %104 = vmatpush1.msra.mxu0 0.0
    %105 = vmatprep.subr.mxu0 0.0
    %106 = vmatpush1.msra.mxu0 0.0
    %107 = vmatprep.subr.mxu0 0.0
    %108 = vmatpush1.msra.mxu0 0.0
    %109 = vmatprep.subr.mxu0 0.0
    %110 = vmatpush1.msra.mxu0 0.0
    %111 = vmatprep.subr.mxu0 0.0
    %112 = vmatpush1.msra.mxu0 0.0
    %113 = vmatprep.subr.mxu0 0.0
    %114 = vmatpush1.msra.mxu0 0.0
    %115 = vmatprep.subr.mxu0 0.0
    %116 = vmatpush1.msra.mxu0 0.0
    %117 = vmatprep.subr.mxu0 0.0
    %118 = vmatpush1.msra.mxu0 0.0
    %119 = vmatprep.subr.mxu0 0.0
    %120 = vmatpush1.msra.mxu0 0.0
    %121 = vmatprep.subr.mxu0 0.0
    %122 = vmatpush1.msra.mxu0 0.0
    %123 = vmatprep.subr.mxu0 0.0
    %124 = vmatpush1.msra.mxu0 0.0
    %125 = vmatprep.subr.mxu0 0.0
    %126 = vmatpush1.msra.mxu0 0.0
    %127 = vmatprep.subr.mxu0 0.0
    %128 = vmatpush1.msra.mxu0 0.0
    %129 = vmatprep.subr.mxu0 0.0
    %130 = vmatpush1.msra.mxu0 0.0
    %131 = vmatprep.subr.mxu0 0.0
    %132 = vmatpush1.msra.mxu0 0.0
    %133 = vmatprep.subr.mxu0 0.0
    %134 = vmatpush1.msra.mxu0 0.0
    %135 = vmatprep.subr.mxu0 0.0
    %136 = vmatpush1.msra.mxu0 0.0
    %137 = vmatprep.subr.mxu0 0.0
    %138 = vmatpush1.msra.mxu0 0.0
    %139 = vmatprep.subr.mxu0 0.0
    %140 = vmatpush1.msra.mxu0 0.0
    %141 = vmatprep.subr.mxu0 0.0
    %142 = vmatpush1.msra.mxu0 0.0
    %143 = vmatprep.subr.mxu0 0.0
    %144 = vmatpush1.msra.mxu0 0.0
    %145 = vmatprep.subr.mxu0 0.0
    %146 = vmatpush1.msra.mxu0 0.0
    %147 = vmatprep.subr.mxu0 0.0
    %148 = vmatpush1.msra.mxu0 0.0
    %149 = vmatprep.subr.mxu0 0.0
    %150 = vmatpush1.msra.mxu0 0.0
    %151 = vmatprep.subr.mxu0 0.0
    %152 = vmatpush1.msra.mxu0 0.0
    %153 = vmatprep.subr.mxu0 0.0
    %154 = vmatpush1.msra.mxu0 0.0
    %155 = vmatprep.subr.mxu0 0.0
    %156 = vmatpush1.msra.mxu0 0.0
    %157 = vmatprep.subr.mxu0 0.0
    %158 = vmatpush1.msra.mxu0 0.0
    %159 = vmatprep.mubr.f32.mxu0 0.0
    %160 = vmatmul.mubr.f32.gmra.mrb[0].mxu0 %v93
    %v161 = vpop.f32.mrb[0].mxu0
    %v162 = vadd.f32 %v89, %v161
    %v163 = vpop.f32.mrb[0].mxu0
    %164 = vdwg.mxu0
    %v165 = vmax.f32 %v162, 0.0
    %v166 = vld [vmem:[#allocation6] sm:$0xff]
    %v167 = vld [vmem:[#allocation6 + $0x8] sm:$0xff]
    %v168 = vld [vmem:[#allocation6 + $0x10] sm:$0xff]
    %v169 = vld [vmem:[#allocation6 + $0x18] sm:$0xff]
    %v170 = vld [vmem:[#allocation6 + $0x20] sm:$0xff]
    %v171 = vld [vmem:[#allocation6 + $0x28] sm:$0xff]
    %v172 = vld [vmem:[#allocation6 + $0x30] sm:$0xff]
    %v173 = vld [vmem:[#allocation6 + $0x38] sm:$0xff]
    %v174 = vld [vmem:[#allocation6 + $0x40] sm:$0xff]
    %v175 = vld [vmem:[#allocation6 + $0x48] sm:$0xff]
    %v176 = vld [vmem:[#allocation6 + $0x50] sm:$0xff]
    %v177 = vld [vmem:[#allocation6 + $0x58] sm:$0xff]
    %v178 = vld [vmem:[#allocation6 + $0x60] sm:$0xff]
    %v179 = vld [vmem:[#allocation6 + $0x68] sm:$0xff]
    %v180 = vld [vmem:[#allocation6 + $0x70] sm:$0xff]
    %v181 = vld [vmem:[#allocation6 + $0x78] sm:$0xff]
    %v182 = vld [vmem:[%s4] sm:$0x1]
    %v184 = vlaneseq
    %v185 = vshrl.u32 %v184, 7
    %v186 = vsub.s32 0, %v185
    %v187 = vrot.slane %v182, %v186
    %189 = vmatprep.subr.mxu0 0.0
    %190 = vmatpush1.msra.mxu0 %v166
    %191 = vmatprep.subr.mxu0 0.0
    %192 = vmatpush1.msra.mxu0 %v167
    %193 = vmatprep.subr.mxu0 0.0
    %194 = vmatpush1.msra.mxu0 %v168
    %195 = vmatprep.subr.mxu0 0.0
    %196 = vmatpush1.msra.mxu0 %v169
    %197 = vmatprep.subr.mxu0 0.0
    %198 = vmatpush1.msra.mxu0 %v170
    %199 = vmatprep.subr.mxu0 0.0
    %200 = vmatpush1.msra.mxu0 %v171
    %201 = vmatprep.subr.mxu0 0.0
    %202 = vmatpush1.msra.mxu0 %v172
    %203 = vmatprep.subr.mxu0 0.0
    %204 = vmatpush1.msra.mxu0 %v173
    %205 = vmatprep.subr.mxu0 0.0
    %206 = vmatpush1.msra.mxu0 %v174
    %207 = vmatprep.subr.mxu0 0.0
    %208 = vmatpush1.msra.mxu0 %v175
    %209 = vmatprep.subr.mxu0 0.0
    %210 = vmatpush1.msra.mxu0 %v176
    %211 = vmatprep.subr.mxu0 0.0
    %212 = vmatpush1.msra.mxu0 %v177
    %213 = vmatprep.subr.mxu0 0.0
    %214 = vmatpush1.msra.mxu0 %v178
    %215 = vmatprep.subr.mxu0 0.0
    %216 = vmatpush1.msra.mxu0 %v179
    %217 = vmatprep.subr.mxu0 0.0
    %218 = vmatpush1.msra.mxu0 %v180
    %219 = vmatprep.subr.mxu0 0.0
    %220 = vmatpush1.msra.mxu0 %v181
    %221 = vmatprep.subr.mxu0 0.0
    %222 = vmatpush1.msra.mxu0 0.0
    %223 = vmatprep.subr.mxu0 0.0
    %224 = vmatpush1.msra.mxu0 0.0
    %225 = vmatprep.subr.mxu0 0.0
    %226 = vmatpush1.msra.mxu0 0.0
    %227 = vmatprep.subr.mxu0 0.0
    %228 = vmatpush1.msra.mxu0 0.0
    %229 = vmatprep.subr.mxu0 0.0
    %230 = vmatpush1.msra.mxu0 0.0
    %231 = vmatprep.subr.mxu0 0.0
    %232 = vmatpush1.msra.mxu0 0.0
    %233 = vmatprep.subr.mxu0 0.0
    %234 = vmatpush1.msra.mxu0 0.0
    %235 = vmatprep.subr.mxu0 0.0
    %236 = vmatpush1.msra.mxu0 0.0
    %237 = vmatprep.subr.mxu0 0.0
    %238 = vmatpush1.msra.mxu0 0.0
    %239 = vmatprep.subr.mxu0 0.0
    %240 = vmatpush1.msra.mxu0 0.0
    %241 = vmatprep.subr.mxu0 0.0
    %242 = vmatpush1.msra.mxu0 0.0
    %243 = vmatprep.subr.mxu0 0.0
    %244 = vmatpush1.msra.mxu0 0.0
    %245 = vmatprep.subr.mxu0 0.0
    %246 = vmatpush1.msra.mxu0 0.0
    %247 = vmatprep.subr.mxu0 0.0
    %248 = vmatpush1.msra.mxu0 0.0
    %249 = vmatprep.subr.mxu0 0.0
    %250 = vmatpush1.msra.mxu0 0.0
    %251 = vmatprep.subr.mxu0 0.0
    %252 = vmatpush1.msra.mxu0 0.0
    %253 = vmatprep.mubr.f32.mxu0 0.0
    %254 = vmatmul.mubr.f32.gmra.mrb[0].mxu0 %v165
    %v255 = vpop.f32.mrb[0].mxu0
    %v256 = vadd.f32 %v187, %v255
    %v257 = vpop.f32.mrb[0].mxu0
    %258 = vdwg.mxu0
    %v259 = vmax.f32 %v256, 0.0
    %v260 = vld [vmem:[#allocation7] sm:$0xff]
    %v261 = vld [vmem:[#allocation7 + $0x8] sm:$0xff]
    %v262 = vld [vmem:[#allocation7 + $0x10] sm:$0xff]
    %v263 = vld [vmem:[#allocation7 + $0x18] sm:$0xff]
    %v264 = vld [vmem:[#allocation7 + $0x20] sm:$0xff]
    %v265 = vld [vmem:[#allocation7 + $0x28] sm:$0xff]
    %v266 = vld [vmem:[#allocation7 + $0x30] sm:$0xff]
    %v267 = vld [vmem:[#allocation7 + $0x38] sm:$0xff]
    %v268 = vld [vmem:[#allocation7 + $0x40] sm:$0xff]
    %v269 = vld [vmem:[#allocation7 + $0x48] sm:$0xff]
    %v270 = vld [vmem:[#allocation7 + $0x50] sm:$0xff]
    %v271 = vld [vmem:[#allocation7 + $0x58] sm:$0xff]
    %v272 = vld [vmem:[#allocation7 + $0x60] sm:$0xff]
    %v273 = vld [vmem:[#allocation7 + $0x68] sm:$0xff]
    %v274 = vld [vmem:[#allocation7 + $0x70] sm:$0xff]
    %v275 = vld [vmem:[#allocation7 + $0x78] sm:$0xff]
    %v276 = vld [vmem:[%s6] sm:$0x1]
    %v278 = vlaneseq
    %v279 = vshrl.u32 %v278, 7
    %v280 = vsub.s32 0, %v279
    %v281 = vrot.slane %v276, %v280
    %283 = vmatprep.subr.mxu0 0.0
    %284 = vmatpush1.msra.mxu0 %v260
    %285 = vmatprep.subr.mxu0 0.0
    %286 = vmatpush1.msra.mxu0 %v261
    %287 = vmatprep.subr.mxu0 0.0
    %288 = vmatpush1.msra.mxu0 %v262
    %289 = vmatprep.subr.mxu0 0.0
    %290 = vmatpush1.msra.mxu0 %v263
    %291 = vmatprep.subr.mxu0 0.0
    %292 = vmatpush1.msra.mxu0 %v264
    %293 = vmatprep.subr.mxu0 0.0
    %294 = vmatpush1.msra.mxu0 %v265
    %295 = vmatprep.subr.mxu0 0.0
    %296 = vmatpush1.msra.mxu0 %v266
    %297 = vmatprep.subr.mxu0 0.0
    %298 = vmatpush1.msra.mxu0 %v267
    %299 = vmatprep.subr.mxu0 0.0
    %300 = vmatpush1.msra.mxu0 %v268
    %301 = vmatprep.subr.mxu0 0.0
    %302 = vmatpush1.msra.mxu0 %v269
    %303 = vmatprep.subr.mxu0 0.0
    %304 = vmatpush1.msra.mxu0 %v270
    %305 = vmatprep.subr.mxu0 0.0
    %306 = vmatpush1.msra.mxu0 %v271
    %307 = vmatprep.subr.mxu0 0.0
    %308 = vmatpush1.msra.mxu0 %v272
    %309 = vmatprep.subr.mxu0 0.0
    %310 = vmatpush1.msra.mxu0 %v273
    %311 = vmatprep.subr.mxu0 0.0
    %312 = vmatpush1.msra.mxu0 %v274
    %313 = vmatprep.subr.mxu0 0.0
    %314 = vmatpush1.msra.mxu0 %v275
    %315 = vmatprep.subr.mxu0 0.0
    %316 = vmatpush1.msra.mxu0 0.0
    %317 = vmatprep.subr.mxu0 0.0
    %318 = vmatpush1.msra.mxu0 0.0
    %319 = vmatprep.subr.mxu0 0.0
    %320 = vmatpush1.msra.mxu0 0.0
    %321 = vmatprep.subr.mxu0 0.0
    %322 = vmatpush1.msra.mxu0 0.0
    %323 = vmatprep.subr.mxu0 0.0
    %324 = vmatpush1.msra.mxu0 0.0
    %325 = vmatprep.subr.mxu0 0.0
    %326 = vmatpush1.msra.mxu0 0.0
    %327 = vmatprep.subr.mxu0 0.0
    %328 = vmatpush1.msra.mxu0 0.0
    %329 = vmatprep.subr.mxu0 0.0
    %330 = vmatpush1.msra.mxu0 0.0
    %331 = vmatprep.subr.mxu0 0.0
    %332 = vmatpush1.msra.mxu0 0.0
    %333 = vmatprep.subr.mxu0 0.0
    %334 = vmatpush1.msra.mxu0 0.0
    %335 = vmatprep.subr.mxu0 0.0
    %336 = vmatpush1.msra.mxu0 0.0
    %337 = vmatprep.subr.mxu0 0.0
    %338 = vmatpush1.msra.mxu0 0.0
    %339 = vmatprep.subr.mxu0 0.0
    %340 = vmatpush1.msra.mxu0 0.0
    %341 = vmatprep.subr.mxu0 0.0
    %342 = vmatpush1.msra.mxu0 0.0
    %343 = vmatprep.subr.mxu0 0.0
    %344 = vmatpush1.msra.mxu0 0.0
    %345 = vmatprep.subr.mxu0 0.0
    %346 = vmatpush1.msra.mxu0 0.0
    %347 = vmatprep.mubr.f32.mxu0 0.0
    %348 = vmatmul.mubr.f32.gmra.mrb[0].mxu0 %v259
    %v349 = vpop.f32.mrb[0].mxu0
    %v350 = vadd.f32 %v281, %v349
    %v351 = vpop.f32.mrb[0].mxu0
    %352 = vdwg.mxu0
    %v353 = vlaneseq
    %v354 = vand.u32 %v353, 127
    %vm355 = vcmp.lt.s32.totalorder %v354, 4
    %v356 = vsel %vm355, %v350, -1e+30
    %357 = vmax.xlane.f32.xlu0 %v356
    %v358 = vpop.xlane.xlu0 %357
    %v359 = vsub.f32 %v356, %v358
    %v360 = vmul.f32 %v359, 1.442695
    %v361 = vpow.pop %v360
    %v362 = vsel %vm355, %v361, 0.0
    %363 = vadd.xlane.f32.xlu0 %v362
    %v364 = vpop.xlane.xlu0 %363
    %v365 = vrcp.pop %v364
    %v366 = vmul.f32 %v362, %v365
    %vm367 = vcmask 31744
    %368 = vst.msk [vmem:[%s7] sm:$0xff] %vm367, %v366
    %370 = vrot.lane.b32.xlu0 %v350, 124
    %v371 = vpop.permute.xlu0 %370
    %vm373 = vcmask 7168
    %374 = vst.msk [vmem:[%s8] sm:$0xff] %vm373, %v371
    // Predicated region
    $region46: #{acnetwork_forward.1} parent=1 // pred_check
      _
    $region47: #{acnetwork_forward.1} parent=1 // pred_check_branch
      %376 = sbr.rel (0) target = $region49
    $region48: #{acnetwork_forward.1} parent=1 // pred_region
      _
    $region49: #{acnetwork_forward.1} parent=1 // pred_fallthru
      _
    // Predicated region
    $region50: #{acnetwork_forward.1} parent=1 // pred_check
      _
    $region51: #{acnetwork_forward.1} parent=1 // pred_check_branch
      %378 = sbr.rel (0) target = $region53
    $region52: #{acnetwork_forward.1} parent=1 // pred_region
      _
    $region53: #{acnetwork_forward.1} parent=1 // pred_fallthru
      _
    // Predicated region
    $region54: #{acnetwork_forward.1} parent=1 // pred_check
      _
    $region55: #{acnetwork_forward.1} parent=1 // pred_check_branch
      %380 = sbr.rel (0) target = $region57
    $region56: #{acnetwork_forward.1} parent=1 // pred_region
      _
    $region57: #{acnetwork_forward.1} parent=1 // pred_fallthru
      _
    // Predicated region
    $region58: #{acnetwork_forward.1} parent=1 // pred_check
      _
    $region59: #{acnetwork_forward.1} parent=1 // pred_check_branch
      %382 = sbr.rel (0) target = $region61
    $region60: #{acnetwork_forward.1} parent=1 // pred_region
      _
    $region61: #{acnetwork_forward.1} parent=1 // pred_fallthru
      _
    %383 = vsyncpa [#allocation3], 1
    %384 = vsyncpa [#allocation5], 1
    %385 = vsyncpa [#allocation8], 1

</llo_original>
